<compile_context>
chip_gen: v6e
topology: v6e:2x2x1
jax: 0.10.0
libtpu: 0.0.40
codegen_flags: <defaults>
</compile_context>

<pallas_src>
import jax
import jax.numpy as jnp
from jax.experimental import pallas as pl
from jax.experimental.pallas import tpu as pltpu


def bias_model_kernel(x_ref, w1t_ref, b1_ref, w2_ref, b2_ref, wct_ref, bc_ref, out_ref):
    TB, S, H = x_ref.shape

    x = x_ref[...]                                   # (TB, S, H), MXU dtype (bf16 or f32)
    x2 = x.reshape(TB * S, H)                        # fuse batch x sequence for one MXU matmul

    # attention1 (weight pre-transposed to (H_in, H_out)) + tanh; accumulate in f32.
    h1 = jnp.tanh(
        jnp.dot(x2, w1t_ref[...], preferred_element_type=jnp.float32) + b1_ref[...]
    )                                                # (TB*S, H) f32

    # attention2 (H -> 1) on the VPU: broadcast multiply + lane reduce, lane-dense (TB, S) result.
    a2 = jnp.sum(h1.reshape(TB, S, H) * w2_ref[...], axis=-1) + b2_ref[...]   # (TB, S)

    # softmax over the sequence axis, done on the lane-dense (TB, S) layout.
    m = jnp.max(a2, axis=-1, keepdims=True)          # (TB, 1)
    e = jnp.exp(a2 - m)                              # (TB, S)
    denom = jnp.sum(e, axis=-1, keepdims=True)       # (TB, 1)
    # EUP approximate reciprocal + one Newton-Raphson step (negligible VALU cost, ~f32 accuracy).
    r = pl.reciprocal(denom, approx=True)
    r = r * (2.0 - denom * r)
    p = e * r                                        # (TB, S)

    # attention-weighted sum over the sequence; f32 cast of x fused here (no x_f32 buffer).
    weighted = jnp.sum(p[:, :, None] * x.astype(jnp.float32), axis=1)         # (TB, H)

    # classifier (weight pre-transposed and zero-padded to (H, NLP)); lane-dense (TB, NLP) store.
    out_ref[...] = (
        jnp.dot(weighted, wct_ref[...], preferred_element_type=jnp.float32) + bc_ref[...]
    )


def bias_model_forward(x, w1, b1, w2, b2, wc, bc, *, matmul_dtype=jnp.bfloat16,
                       max_batch_block=None, min_grid_steps=None):
    """Forward pass of BiasModel. Weights use nn.Linear layout: W (out, in), b (out,)."""
    B, S, H = x.shape
    A = w2.shape[0]
    assert A == 1, "attention_size must be 1 (broadcast against hidden in the weighted sum)"
    NL = wc.shape[0]
    NLP = ((NL + 127) // 128) * 128                  # lane-dense output width (unmasked vst)

    matmul_dtype = jnp.dtype(matmul_dtype) if matmul_dtype is not None else x.dtype
    bx = jnp.dtype(matmul_dtype).itemsize

    # ---- VMEM budget -> TB (batch rows per grid step) ---------------------------------------
    try:
        phys_vmem = int(getattr(pltpu.get_tpu_info(), "vmem_capacity_bytes",
                                128 * 1024 * 1024))
    except Exception:
        phys_vmem = 64 * 1024 * 1024                 # v7x-safe fallback
    budget = min(phys_vmem // 2, 48 * 1024 * 1024)

    # Per batch-row VMEM: x (double-buffered) + h1 (f32) + p*x broadcast temp (f32)
    # + double-buffered output slab + small softmax / weighted temps.
    per_row = S * H * (2 * bx + 8) + 2 * NLP * 4 + S * 64 + H * 8
    # Grid-invariant weights (counted double-buffered, Pallas default) + compiler slack.
    fixed = 2 * (H * H * bx + H * NLP * 4 + 2 * H * 4 + NLP * 4 + 4) + (2 << 20)

    tb_cap = max(8, (max(budget - fixed, per_row * 8) // per_row) // 8 * 8)
    if max_batch_block is not None:
        tb_cap = max(1, min(tb_cap, max_batch_block))

    # Best-effort megacore detection (v7x has 2 TCs); force >=2 grid steps for large batches.
    if min_grid_steps is None:
        min_grid_steps = 1
        try:
            min_grid_steps = max(1, min(int(getattr(jax.devices()[0], "num_cores", 1)), 8))
        except Exception:
            pass
    steps = min_grid_steps if (min_grid_steps > 1 and B >= 16 * min_grid_steps) else 1

    if B <= tb_cap and steps == 1:
        TB = B                                       # single block; block dim == full array dim
    else:
        per_step = -(-B // steps)                    # cdiv
        TB = min(tb_cap, ((per_step + 7) // 8) * 8)
        TB = max(8, (TB // 8) * 8)

    B_pad = -(-B // TB) * TB
    if B_pad != B:
        x = jnp.pad(x, ((0, B_pad - B), (0, 0), (0, 0)))

    needed = fixed + per_row * TB
    vmem_limit_bytes = int(min(max(phys_vmem - (2 << 20), needed),
                               max(needed + (4 << 20), 32 * 1024 * 1024)))

    # ---- hoist casts / transposes / padding out of the kernel --------------------------------
    x_in = x.astype(matmul_dtype)
    w1t = w1.T.astype(matmul_dtype)                                  # (H_in, H_out)
    b1_2d = b1.reshape(1, H).astype(jnp.float32)
    w2_2d = w2.reshape(1, H).astype(jnp.float32)                     # VPU path, f32
    b2_2d = b2.reshape(1, 1).astype(jnp.float32)
    wct_p = jnp.zeros((H, NLP), jnp.float32).at[:, :NL].set(wc.T.astype(jnp.float32))
    bc_p = jnp.zeros((1, NLP), jnp.float32).at[0, :NL].set(bc.astype(jnp.float32))

    out = pl.pallas_call(
        bias_model_kernel,
        out_shape=jax.ShapeDtypeStruct((B_pad, NLP), jnp.float32),
        grid_spec=pltpu.PrefetchScalarGridSpec(
            num_scalar_prefetch=0,
            grid=(B_pad // TB,),
            in_specs=[
                pl.BlockSpec((TB, S, H), lambda i: (i, 0, 0)),   # x: TB batch rows per step
                pl.BlockSpec((H, H), lambda i: (0, 0)),          # W1^T (grid-invariant)
                pl.BlockSpec((1, H), lambda i: (0, 0)),          # b1
                pl.BlockSpec((1, H), lambda i: (0, 0)),          # W2 row
                pl.BlockSpec((1, 1), lambda i: (0, 0)),          # b2
                pl.BlockSpec((H, NLP), lambda i: (0, 0)),        # Wc^T, zero-padded to NLP cols
                pl.BlockSpec((1, NLP), lambda i: (0, 0)),        # bc, zero-padded
            ],
            out_specs=pl.BlockSpec((TB, NLP), lambda i: (i, 0)),
        ),
        compiler_params=pltpu.CompilerParams(
            dimension_semantics=("parallel",),
            vmem_limit_bytes=vmem_limit_bytes,
        ),
    )(x_in, w1t, b1_2d, w2_2d, b2_2d, wct_p, bc_p)
    return out[:B, :NL]


def reference_forward(x, w1, b1, w2, b2, wc, bc):
    # Pure-JAX reference mirroring the PyTorch forward (dropout = identity).
    h1 = jnp.tanh(jnp.einsum("bsh,oh->bso", x, w1) + b1)
    a2 = jnp.einsum("bsh,ah->bsa", h1, w2) + b2
    p = jax.nn.softmax(a2, axis=1)
    weighted = jnp.sum(p * x, axis=1)
    return jnp.einsum("bh,oh->bo", weighted, wc) + bc


if __name__ == "__main__":
    # Small shapes consistent with the module: (B, S, H), attention_size=1, num_labels=3.
    B, S, H = 2, 8, 32
    A = 1
    NUM_LABELS = 3

    key = jax.random.PRNGKey(0)
    kx, k1, k2, k3, k4, k5, k6 = jax.random.split(key, 7)

    x = jax.random.normal(kx, (B, S, H), dtype=jnp.float32)

    # nn.Linear-style parameters: weight (out, in), bias (out,).
    w1 = jax.random.normal(k1, (H, H), dtype=jnp.float32) * (1.0 / jnp.sqrt(H))
    b1 = jax.random.normal(k2, (H,), dtype=jnp.float32) * 0.01
    w2 = jax.random.normal(k3, (A, H), dtype=jnp.float32) * (1.0 / jnp.sqrt(H))
    b2 = jax.random.normal(k4, (A,), dtype=jnp.float32) * 0.01
    wc = jax.random.normal(k5, (NUM_LABELS, H), dtype=jnp.float32) * (1.0 / jnp.sqrt(H))
    bc = jax.random.normal(k6, (NUM_LABELS,), dtype=jnp.float32) * 0.01

    # 1) f32 MXU-input path, whole batch in one block — tight tolerance vs the f32 reference.
    logits = bias_model_forward(x, w1, b1, w2, b2, wc, bc, matmul_dtype=jnp.float32)
    logits = jax.block_until_ready(logits)
    ref = reference_forward(x, w1, b1, w2, b2, wc, bc)
    assert logits.shape == (B, NUM_LABELS)
    assert jnp.allclose(logits, ref, atol=1e-3, rtol=1e-3), (logits, ref)

    # 2) Default bf16 MXU-input path + multi-step batch grid (exercises blocking/padding/slicing).
    B2 = 20
    x2 = jax.random.normal(jax.random.PRNGKey(1), (B2, S, H), dtype=jnp.float32)
    logits2 = bias_model_forward(x2, w1, b1, w2, b2, wc, bc, max_batch_block=8)
    logits2 = jax.block_until_ready(logits2)
    ref2 = reference_forward(x2, w1, b1, w2, b2, wc, bc)
    assert logits2.shape == (B2, NUM_LABELS)
    assert jnp.allclose(logits2, ref2, atol=5e-2, rtol=5e-2), (logits2, ref2)

    print("KERNEL_OK")
</pallas_src>

<mosaic_0001>
module attributes {stable_mosaic.version = 11 : i64} {
  func.func @bias_model_kernel(%arg0: i32, %arg1: memref<2x8x32xf32, #tpu.memory_space<vmem>>, %arg2: memref<32x32xf32, #tpu.memory_space<vmem>>, %arg3: memref<1x32xf32, #tpu.memory_space<vmem>>, %arg4: memref<1x32xf32, #tpu.memory_space<vmem>>, %arg5: memref<1x1xf32, #tpu.memory_space<vmem>>, %arg6: memref<32x128xf32, #tpu.memory_space<vmem>>, %arg7: memref<1x128xf32, #tpu.memory_space<vmem>>, %arg8: memref<2x128xf32, #tpu.memory_space<vmem>>) attributes {dimension_semantics = [#tpu.dimension_semantics<parallel>], iteration_bounds = array<i64: 1>, scalar_prefetch = 0 : i64, scratch_operands = 0 : i64, tpu.core_type = #tpu.core_type<tc>, window_params = [{transform_indices = @transform_0, window_bounds = array<i64: 2, 8, 32>}, {pipeline_mode = #tpu.pipeline_mode<synchronous>, transform_indices = @transform_1, window_bounds = array<i64: 32, 32>}, {pipeline_mode = #tpu.pipeline_mode<synchronous>, transform_indices = @transform_2, window_bounds = array<i64: 1, 32>}, {pipeline_mode = #tpu.pipeline_mode<synchronous>, transform_indices = @transform_3, window_bounds = array<i64: 1, 32>}, {pipeline_mode = #tpu.pipeline_mode<synchronous>, transform_indices = @transform_4, window_bounds = array<i64: 1, 1>}, {pipeline_mode = #tpu.pipeline_mode<synchronous>, transform_indices = @transform_5, window_bounds = array<i64: 32, 128>}, {pipeline_mode = #tpu.pipeline_mode<synchronous>, transform_indices = @transform_6, window_bounds = array<i64: 1, 128>}, {transform_indices = @transform_7, window_bounds = array<i64: 2, 128>}]} {
    %c0 = arith.constant 0 : index
    %c0_0 = arith.constant 0 : index
    %c0_1 = arith.constant 0 : index
    %0 = vector.load %arg1[%c0, %c0_0, %c0_1] : memref<2x8x32xf32, #tpu.memory_space<vmem>>, vector<2x8x32xf32>
    %1 = vector.shape_cast %0 : vector<2x8x32xf32> to vector<16x32xf32>
    %c0_2 = arith.constant 0 : index
    %c0_3 = arith.constant 0 : index
    %2 = vector.load %arg2[%c0_2, %c0_3] : memref<32x32xf32, #tpu.memory_space<vmem>>, vector<32x32xf32>
    %cst = arith.constant dense<0.000000e+00> : vector<16x32xf32>
    %3 = tpu.matmul %1, %2, %cst {dimension_numbers = #tpu.dot_dimension_numbers<[1], [0], [0], [1], [0, 0, 1, 1], [], []>} : vector<16x32xf32>, vector<32x32xf32>, vector<16x32xf32> -> vector<16x32xf32>
    %c0_4 = arith.constant 0 : index
    %c0_5 = arith.constant 0 : index
    %4 = vector.load %arg3[%c0_4, %c0_5] : memref<1x32xf32, #tpu.memory_space<vmem>>, vector<1x32xf32>
    %5 = vector.broadcast %4 : vector<1x32xf32> to vector<16x32xf32>
    %6 = arith.addf %3, %5 : vector<16x32xf32>
    %7 = math.tanh %6 : vector<16x32xf32>
    %8 = vector.shape_cast %7 : vector<16x32xf32> to vector<2x8x32xf32>
    %c0_6 = arith.constant 0 : index
    %c0_7 = arith.constant 0 : index
    %9 = vector.load %arg4[%c0_6, %c0_7] : memref<1x32xf32, #tpu.memory_space<vmem>>, vector<1x32xf32>
    %10 = vector.shape_cast %9 : vector<1x32xf32> to vector<1x1x32xf32>
    %11 = vector.broadcast %10 : vector<1x1x32xf32> to vector<2x8x32xf32>
    %12 = arith.mulf %8, %11 : vector<2x8x32xf32>
    %cst_8 = arith.constant dense<0.000000e+00> : vector<2x8xf32>
    %13 = vector.multi_reduction <add>, %12, %cst_8 [2] : vector<2x8x32xf32> to vector<2x8xf32>
    %c0_9 = arith.constant 0 : index
    %c0_10 = arith.constant 0 : index
    %14 = vector.load %arg5[%c0_9, %c0_10] : memref<1x1xf32, #tpu.memory_space<vmem>>, vector<1x1xf32>
    %15 = vector.broadcast %14 : vector<1x1xf32> to vector<2x8xf32>
    %16 = arith.addf %13, %15 : vector<2x8xf32>
    %cst_11 = arith.constant dense<0xFF800000> : vector<2xf32>
    %17 = vector.multi_reduction <maximumf>, %16, %cst_11 [1] : vector<2x8xf32> to vector<2xf32>
    %18 = vector.shape_cast %17 : vector<2xf32> to vector<2x1xf32>
    %19 = vector.broadcast %18 : vector<2x1xf32> to vector<2x8xf32>
    %20 = arith.subf %16, %19 : vector<2x8xf32>
    %21 = math.exp %20 : vector<2x8xf32>
    %cst_12 = arith.constant dense<0.000000e+00> : vector<2xf32>
    %22 = vector.multi_reduction <add>, %21, %cst_12 [1] : vector<2x8xf32> to vector<2xf32>
    %23 = vector.shape_cast %22 : vector<2xf32> to vector<2x1xf32>
    %24 = tpu.reciprocal %23 {approx = true} : vector<2x1xf32> -> vector<2x1xf32>
    %25 = arith.mulf %23, %24 : vector<2x1xf32>
    %cst_13 = arith.constant 2.000000e+00 : f32
    %26 = vector.broadcast %cst_13 : f32 to vector<2x1xf32>
    %27 = arith.subf %26, %25 : vector<2x1xf32>
    %28 = arith.mulf %24, %27 : vector<2x1xf32>
    %29 = vector.broadcast %28 : vector<2x1xf32> to vector<2x8xf32>
    %30 = arith.mulf %21, %29 : vector<2x8xf32>
    %31 = vector.shape_cast %30 : vector<2x8xf32> to vector<2x8x1xf32>
    %32 = vector.broadcast %31 : vector<2x8x1xf32> to vector<2x8x32xf32>
    %33 = arith.mulf %32, %0 : vector<2x8x32xf32>
    %cst_14 = arith.constant dense<0.000000e+00> : vector<2x32xf32>
    %34 = vector.multi_reduction <add>, %33, %cst_14 [1] : vector<2x8x32xf32> to vector<2x32xf32>
    %c0_15 = arith.constant 0 : index
    %c0_16 = arith.constant 0 : index
    %35 = vector.load %arg6[%c0_15, %c0_16] : memref<32x128xf32, #tpu.memory_space<vmem>>, vector<32x128xf32>
    %cst_17 = arith.constant dense<0.000000e+00> : vector<2x128xf32>
    %36 = tpu.matmul %34, %35, %cst_17 {dimension_numbers = #tpu.dot_dimension_numbers<[1], [0], [0], [1], [0, 0, 1, 1], [], []>} : vector<2x32xf32>, vector<32x128xf32>, vector<2x128xf32> -> vector<2x128xf32>
    %c0_18 = arith.constant 0 : index
    %c0_19 = arith.constant 0 : index
    %37 = vector.load %arg7[%c0_18, %c0_19] : memref<1x128xf32, #tpu.memory_space<vmem>>, vector<1x128xf32>
    %38 = vector.broadcast %37 : vector<1x128xf32> to vector<2x128xf32>
    %39 = arith.addf %36, %38 : vector<2x128xf32>
    %c0_20 = arith.constant 0 : index
    %c0_21 = arith.constant 0 : index
    %40 = vector.load %arg8[%c0_20, %c0_21] : memref<2x128xf32, #tpu.memory_space<vmem>>, vector<2x128xf32>
    tpu.vector_store %arg8[%c0_20, %c0_21], %39 {strides = array<i32>} : memref<2x128xf32, #tpu.memory_space<vmem>>, vector<2x128xf32>,
    return
  }
  func.func @transform_0(%arg0: i32) -> (i32, i32, i32) {
    %c0_i32 = arith.constant 0 : i32
    %c0_i32_0 = arith.constant 0 : i32
    %c0_i32_1 = arith.constant 0 : i32
    return %arg0, %c0_i32, %c0_i32_0 : i32, i32, i32
  }
  func.func @transform_1(%arg0: i32) -> (i32, i32) {
    %c0_i32 = arith.constant 0 : i32
    %c0_i32_0 = arith.constant 0 : i32
    %c0_i32_1 = arith.constant 0 : i32
    return %c0_i32, %c0_i32_0 : i32, i32
  }
  func.func @transform_2(%arg0: i32) -> (i32, i32) {
    %c0_i32 = arith.constant 0 : i32
    %c0_i32_0 = arith.constant 0 : i32
    %c0_i32_1 = arith.constant 0 : i32
    return %c0_i32, %c0_i32_0 : i32, i32
  }
  func.func @transform_3(%arg0: i32) -> (i32, i32) {
    %c0_i32 = arith.constant 0 : i32
    %c0_i32_0 = arith.constant 0 : i32
    %c0_i32_1 = arith.constant 0 : i32
    return %c0_i32, %c0_i32_0 : i32, i32
  }
  func.func @transform_4(%arg0: i32) -> (i32, i32) {
    %c0_i32 = arith.constant 0 : i32
    %c0_i32_0 = arith.constant 0 : i32
    %c0_i32_1 = arith.constant 0 : i32
    return %c0_i32, %c0_i32_0 : i32, i32
  }
  func.func @transform_5(%arg0: i32) -> (i32, i32) {
    %c0_i32 = arith.constant 0 : i32
    %c0_i32_0 = arith.constant 0 : i32
    %c0_i32_1 = arith.constant 0 : i32
    return %c0_i32, %c0_i32_0 : i32, i32
  }
  func.func @transform_6(%arg0: i32) -> (i32, i32) {
    %c0_i32 = arith.constant 0 : i32
    %c0_i32_0 = arith.constant 0 : i32
    %c0_i32_1 = arith.constant 0 : i32
    return %c0_i32, %c0_i32_0 : i32, i32
  }
  func.func @transform_7(%arg0: i32) -> (i32, i32) {
    %c0_i32 = arith.constant 0 : i32
    %c0_i32_0 = arith.constant 0 : i32
    return %arg0, %c0_i32 : i32, i32
  }
}

</mosaic_0001>

<llo_original>
// kernel: tpu_custom_call.1
$region0: #{tpu_custom_call.1}
  #allocation0 [shape = 'u32[]', space=smem, size = 0x4, offset = 0x4, fixed_abs, tag = 'smem constant byte address 0x4 - core index']
  #allocation1 [shape = 'u32[144,128]{1,0:T(1,128)}', space=vmem, size = 0x12000, scoped, tag = 'internal scratch']
  #allocation2 [shape = 'f32[1,1]{1,0:T(1,128)S(1)}', space=vmem, size = 0x200, scoped, tag = 'scoped memory for tpu_custom_call.1']
  %s0 = inlined_call_operand.hbm [shape: f32[2,8,32], index: 0, kind: input, shape index: {}]
  %s1 = inlined_call_operand.hbm [shape: f32[32,32], index: 1, kind: input, shape index: {}]
  %s2 = inlined_call_operand.vmem [shape: f32[1,32], index: 2, kind: input, shape index: {}]
  %s3 = inlined_call_operand.vmem [shape: f32[1,32], index: 3, kind: input, shape index: {}]
  %s4 = inlined_call_operand.<no memory space> [shape: f32[1,1], index: 4, kind: input, shape index: {}]
  %s5 = inlined_call_operand.hbm [shape: f32[32,128], index: 5, kind: input, shape index: {}]
  %s6 = inlined_call_operand.vmem [shape: f32[1,128], index: 6, kind: input, shape index: {}]
  %s7 = inlined_call_operand.hbm [shape: f32[2,128], index: 7, kind: output, shape index: {}]
  %s8 = sld [smem:[#allocation0]]
  $region50: #{tpu_custom_call.1} parent=0
    _
  %s10 = ssub.s32 1, %s8
  %s11 = scalar_select 0, %s10, %s8
  %v12 = vstv %s4
  %13 = vst [vmem:[#allocation2] sm:$0x1] %v12
  $region1: #{tpu_custom_call.1} parent=0
    #allocation3 [shape = 'u8[8192]{0}', space=vmem, size = 0x2000, scoped, tag = 'input window, operand 0, single buffered']
    #allocation4 [shape = 's32[1]{0}', space=sflag, size = 0x4, scoped, tag = 'scoped memory for tpu_custom_call.1']
    #allocation5 [shape = 's32[1]{0}', space=sflag, size = 0x4, scoped, tag = 'scoped memory for tpu_custom_call.1']
    #allocation6 [shape = 'u8[16384]{0}', space=vmem, size = 0x4000, scoped, tag = 'input window, operand 1, single buffered']
    #allocation7 [shape = 's32[1]{0}', space=sflag, size = 0x4, scoped, tag = 'scoped memory for tpu_custom_call.1']
    #allocation8 [shape = 'u8[16384]{0}', space=vmem, size = 0x4000, scoped, tag = 'input window, operand 5, single buffered']
    #allocation9 [shape = 'u8[1024]{0}', space=vmem, size = 0x400, scoped, tag = 'output window, operand 0, single buffered']
    %14 = vsyncpa [#allocation4], 0
    %15 = vsyncpa [#allocation7], 0
    %16 = vsyncpa [#allocation5], 0
    // Predicated region
    $region2: #{tpu_custom_call.1} parent=1 // pred_check
      _
    $region3: #{tpu_custom_call.1} parent=1 // pred_check_branch
      %18 = sbr.rel (0) target = $region5
    $region4: #{tpu_custom_call.1} parent=1 // pred_region
      %s20 = ssub.s32 256, 256
      %21 = vsyncadd [#allocation4], %s20
      %s22 = sshll.u32 [#allocation3], 4
      %s23 = int_to_ptr.vmem [resolvable:$true] %s22
      %28 = dma.hbm_to_vmem [thread:$0]  %s0, 256, %s23, [#allocation4], 128, 128, 8
    $region5: #{tpu_custom_call.1} parent=1 // pred_fallthru
      _
    // Predicated region
    $region6: #{tpu_custom_call.1} parent=1 // pred_check
      _
    $region7: #{tpu_custom_call.1} parent=1 // pred_check_branch
      %30 = sbr.rel (0) target = $region9
    $region8: #{tpu_custom_call.1} parent=1 // pred_region
      %s32 = ssub.s32 512, 512
      %33 = vsyncadd [#allocation7], %s32
      %s34 = sshll.u32 [#allocation6], 4
      %s35 = int_to_ptr.vmem [resolvable:$true] %s34
      %40 = dma.hbm_to_vmem [thread:$0]  %s1, 512, %s35, [#allocation7], 128, 128, 8
    $region9: #{tpu_custom_call.1} parent=1 // pred_fallthru
      _
    // Predicated region
    $region10: #{tpu_custom_call.1} parent=1 // pred_check
      _
    $region11: #{tpu_custom_call.1} parent=1 // pred_check_branch
      %42 = sbr.rel (0) target = $region13
    $region12: #{tpu_custom_call.1} parent=1 // pred_region
      _
    $region13: #{tpu_custom_call.1} parent=1 // pred_fallthru
      _
    // Predicated region
    $region14: #{tpu_custom_call.1} parent=1 // pred_check
      _
    $region15: #{tpu_custom_call.1} parent=1 // pred_check_branch
      %44 = sbr.rel (0) target = $region17
    $region16: #{tpu_custom_call.1} parent=1 // pred_region
      _
    $region17: #{tpu_custom_call.1} parent=1 // pred_fallthru
      _
    // Predicated region
    $region18: #{tpu_custom_call.1} parent=1 // pred_check
      _
    $region19: #{tpu_custom_call.1} parent=1 // pred_check_branch
      %46 = sbr.rel (0) target = $region21
    $region20: #{tpu_custom_call.1} parent=1 // pred_region
      _
    $region21: #{tpu_custom_call.1} parent=1 // pred_fallthru
      _
    // Predicated region
    $region22: #{tpu_custom_call.1} parent=1 // pred_check
      _
    $region23: #{tpu_custom_call.1} parent=1 // pred_check_branch
      %48 = sbr.rel (0) target = $region25
    $region24: #{tpu_custom_call.1} parent=1 // pred_region
      %s50 = ssub.s32 512, 512
      %51 = vsyncadd [#allocation7], %s50
      %s52 = sshll.u32 [#allocation8], 4
      %s53 = int_to_ptr.vmem [resolvable:$true] %s52
      %58 = dma.hbm_to_vmem [thread:$0]  %s5, 512, %s53, [#allocation7], 128, 128, 8
    $region25: #{tpu_custom_call.1} parent=1 // pred_fallthru
      _
    // Predicated region
    $region26: #{tpu_custom_call.1} parent=1 // pred_check
      _
    $region27: #{tpu_custom_call.1} parent=1 // pred_check_branch
      %60 = sbr.rel (0) target = $region29
    $region28: #{tpu_custom_call.1} parent=1 // pred_region
      _
    $region29: #{tpu_custom_call.1} parent=1 // pred_fallthru
      _
    // Predicated region
    $region30: #{tpu_custom_call.1} parent=1 // pred_check
      _
    $region31: #{tpu_custom_call.1} parent=1 // pred_check_branch
      %62 = sbr.rel (0) target = $region33
    $region32: #{tpu_custom_call.1} parent=1 // pred_region
      %63 = dma.done [#allocation4], 256
    $region33: #{tpu_custom_call.1} parent=1 // pred_fallthru
      _
    // Predicated region
    $region34: #{tpu_custom_call.1} parent=1 // pred_check
      _
    $region35: #{tpu_custom_call.1} parent=1 // pred_check_branch
      %65 = sbr.rel (0) target = $region37
    $region36: #{tpu_custom_call.1} parent=1 // pred_region
      %66 = dma.done [#allocation7], 512
    $region37: #{tpu_custom_call.1} parent=1 // pred_fallthru
      _
    // Predicated region
    $region38: #{tpu_custom_call.1} parent=1 // pred_check
      _
    $region39: #{tpu_custom_call.1} parent=1 // pred_check_branch
      %68 = sbr.rel (0) target = $region41
    $region40: #{tpu_custom_call.1} parent=1 // pred_region
      %69 = dma.done [#allocation7], 512
    $region41: #{tpu_custom_call.1} parent=1 // pred_fallthru
      _
    %v70 = vld [vmem:[#allocation3] sm:$0xff]
    %v71 = vld [vmem:[#allocation3 + $0x8] sm:$0xff]
    %v72 = vld [vmem:[#allocation6] sm:$0xff]
    %v73 = vld [vmem:[#allocation6 + $0x8] sm:$0xff]
    %v74 = vld [vmem:[#allocation6 + $0x10] sm:$0xff]
    %v75 = vld [vmem:[#allocation6 + $0x18] sm:$0xff]
    %v76 = vld [vmem:[%s2] sm:$0x1]
    %v78 = vlaneseq
    %v79 = vshrl.u32 %v78, 7
    %v80 = vsub.s32 0, %v79
    %v81 = vrot.slane %v76, %v80
    %vm83 = vcmask 261120
    %v85 = vsel %vm83, %v70, 0
    %v88 = vsel %vm83, %v71, 0
    %90 = vmatprep.subr.mxu0 0.0
    %91 = vmatpush1.msra.mxu0 0.0
    %92 = vmatprep.subr.mxu0 0.0
    %93 = vmatpush1.msra.mxu0 0.0
    %94 = vmatprep.subr.mxu0 0.0
    %95 = vmatpush1.msra.mxu0 0.0
    %96 = vmatprep.subr.mxu0 0.0
    %97 = vmatpush1.msra.mxu0 0.0
    %98 = vmatprep.subr.mxu0 0.0
    %99 = vmatpush1.msra.mxu0 0.0
    %100 = vmatprep.subr.mxu0 0.0
    %101 = vmatpush1.msra.mxu0 0.0
    %102 = vmatprep.subr.mxu0 0.0
    %103 = vmatpush1.msra.mxu0 0.0
    %104 = vmatprep.subr.mxu0 0.0
    %105 = vmatpush1.msra.mxu0 0.0
    %106 = vmatprep.subr.mxu0 0.0
    %107 = vmatpush1.msra.mxu0 0.0
    %108 = vmatprep.subr.mxu0 0.0
    %109 = vmatpush1.msra.mxu0 0.0
    %110 = vmatprep.subr.mxu0 0.0
    %111 = vmatpush1.msra.mxu0 0.0
    %112 = vmatprep.subr.mxu0 0.0
    %113 = vmatpush1.msra.mxu0 0.0
    %114 = vmatprep.subr.mxu0 0.0
    %115 = vmatpush1.msra.mxu0 %v75
    %116 = vmatprep.subr.mxu0 0.0
    %117 = vmatpush1.msra.mxu0 %v74
    %118 = vmatprep.subr.mxu0 0.0
    %119 = vmatpush1.msra.mxu0 %v73
    %120 = vmatprep.subr.mxu0 0.0
    %121 = vmatpush1.msra.mxu0 %v72
    %122 = vmatprep.subr.mxu0 0.0
    %123 = vmatpush2.msra.mxu0 0.0
    %124 = vmatprep.subr.mxu0 0.0
    %125 = vmatpush2.msra.mxu0 0.0
    %126 = vmatprep.subr.mxu0 0.0
    %127 = vmatpush2.msra.mxu0 0.0
    %128 = vmatprep.subr.mxu0 0.0
    %129 = vmatpush2.msra.mxu0 0.0
    %130 = vmatprep.subr.mxu0 0.0
    %131 = vmatpush2.msra.mxu0 0.0
    %132 = vmatprep.subr.mxu0 0.0
    %133 = vmatpush2.msra.mxu0 0.0
    %134 = vmatprep.subr.mxu0 0.0
    %135 = vmatpush2.msra.mxu0 0.0
    %136 = vmatprep.subr.mxu0 0.0
    %137 = vmatpush2.msra.mxu0 0.0
    %138 = vmatprep.subr.mxu0 0.0
    %139 = vmatpush2.msra.mxu0 0.0
    %140 = vmatprep.subr.mxu0 0.0
    %141 = vmatpush2.msra.mxu0 0.0
    %142 = vmatprep.subr.mxu0 0.0
    %143 = vmatpush2.msra.mxu0 0.0
    %144 = vmatprep.subr.mxu0 0.0
    %145 = vmatpush2.msra.mxu0 0.0
    %146 = vmatprep.subr.mxu0 0.0
    %147 = vmatpush2.msra.mxu0 0.0
    %148 = vmatprep.subr.mxu0 0.0
    %149 = vmatpush2.msra.mxu0 0.0
    %150 = vmatprep.subr.mxu0 0.0
    %151 = vmatpush2.msra.mxu0 0.0
    %152 = vmatprep.subr.mxu0 0.0
    %153 = vmatpush2.msra.mxu0 0.0
    %154 = vmatprep.mubr.f32.mxu0 0.0
    %155 = vmatmul.mubr.f32.gmra.mxu0 %v85
    %v156 = vpop.f32.mrf.mxu0
    %v157 = vadd.f32 %v81, %v156
    %v158 = vpop.f32.mrf.mxu0
    %159 = vmatprep.mubr.f32.mxu0 0.0
    %160 = vmatmul.mubr.f32.gmra.mxu0 %v88
    %v161 = vpop.f32.mrf.mxu0
    %v162 = vadd.f32 %v81, %v161
    %v163 = vpop.f32.mrf.mxu0
    %164 = vdwg.mxu0
    %v165 = vtanh.pop %v157
    %v166 = vtanh.pop %v162
    %v167 = vld [vmem:[%s3] sm:$0x1]
    %v169 = vlaneseq
    %v170 = vshrl.u32 %v169, 7
    %v171 = vsub.s32 0, %v170
    %v172 = vrot.slane %v167, %v171
    %v174 = vmul.f32 %v165, %v172
    %v175 = vmul.f32 %v166, %v172
    %v176 = vsel %vm83, %v174, 0.0
    %177 = vadd.xlane.f32.xlu0 %v176
    %v178 = vpop.xlane.xlu0 %177
    %v179 = vsel %vm83, %v175, 0.0
    %180 = vadd.xlane.f32.xlu0 %v179
    %v181 = vpop.xlane.xlu0 %180
    %v182 = vld [vmem:[#allocation2] sm:$0x1]
    %v184 = vlaneseq
    %v185 = vshrl.u32 %v184, 7
    %v186 = vsub.s32 0, %v185
    %v187 = vrot.slane %v182, %v186
    %188 = vset.pattern.permute.xlu0 0
    %189 = vperm.xlu0 %188, %v187
    %v190 = vpop.permute.xlu0 %189
    %v192 = vadd.f32 %v178, %v190
    %v193 = vadd.f32 %v181, %v190
    %v196 = vlaneseq
    %v197 = vand.u32 %v196, 127
    %v198 = vlaneseq
    %v199 = vshrl.u32 %v198, 7
    %v200 = vsub.s32 %v197, %v199
    %v201 = vrot.slane %v192, %v200
    %v202 = vlaneseq
    %v203 = vshrl.u32 %v202, 7
    %v204 = vsub.s32 %v197, %v203
    %v205 = vrot.slane %v193, %v204
    %vm206 = vcmask 1041409
    %v207 = vsel %vm206, %v205, %v201
    %vm209 = vcmask 58368
    %v210 = vsel %vm209, %v207, -inf
    %211 = vmax.xlane.f32.xlu0 %v210
    %v212 = vpop.xlane.xlu0 %211
    %v214 = vlaneseq
    %v215 = vshrl.u32 %v214, 7
    %v216 = vsub.s32 0, %v215
    %v217 = vrot.slane %v212, %v216
    %v218 = vlaneseq
    %v219 = vshrl.u32 %v218, 7
    %v220 = vsub.s32 1, %v219
    %v221 = vrot.slane %v212, %v220
    %v224 = vsub.f32 %v192, %v217
    %v225 = vsub.f32 %v193, %v221
    %v226 = vmul.f32 %v224, 1.442695
    %v227 = vpow.pop %v226
    %v228 = vmul.f32 %v225, 1.442695
    %v229 = vpow.pop %v228
    %232 = vset.pattern.permute.xlu0 0
    %233 = vperm.xlu0 %232, %v227
    %v234 = vpop.permute.xlu0 %233
    %235 = vset.pattern.permute.xlu0 0
    %236 = vperm.xlu0 %235, %v229
    %v237 = vpop.permute.xlu0 %236
    %v238 = vlaneseq
    %v239 = vshrl.u32 %v238, 7
    %v240 = vsub.s32 %v197, %v239
    %v241 = vrot.slane %v234, %v240
    %v242 = vlaneseq
    %v243 = vshrl.u32 %v242, 7
    %v244 = vsub.s32 %v197, %v243
    %v245 = vrot.slane %v237, %v244
    %v246 = vsel %vm206, %v245, %v241
    %v248 = vsel %vm209, %v246, 0.0
    %249 = vadd.xlane.f32.xlu0 %v248
    %v250 = vpop.xlane.xlu0 %249
    %v251 = vrcp.pop %v250
    %v252 = vmul.f32 %v250, %v251
    %v253 = vsub.f32 2.0, %v252
    %v254 = vmul.f32 %v251, %v253
    %v256 = vlaneseq
    %v257 = vshrl.u32 %v256, 7
    %v258 = vsub.s32 0, %v257
    %v259 = vrot.slane %v254, %v258
    %v260 = vlaneseq
    %v261 = vshrl.u32 %v260, 7
    %v262 = vsub.s32 1, %v261
    %v263 = vrot.slane %v254, %v262
    %v266 = vmul.f32 %v227, %v259
    %v267 = vmul.f32 %v229, %v263
    %269 = vset.pattern.permute.xlu0 0
    %270 = vperm.xlu0 %269, %v266
    %v271 = vpop.permute.xlu0 %270
    %274 = vset.pattern.permute.xlu0 0
    %275 = vperm.xlu0 %274, %v267
    %v276 = vpop.permute.xlu0 %275
    %v278 = vmul.f32 %v271, %v70
    %v279 = vmul.f32 %v276, %v71
    %v280 = vsel %vm83, %v278, 0.0
    %v281 = vrot.slane %v280, 4
    %v282 = vadd.f32 %v280, %v281
    %v283 = vrot.slane %v282, 2
    %v284 = vadd.f32 %v282, %v283
    %v285 = vrot.slane %v284, 1
    %v286 = vadd.f32 %v284, %v285
    %v287 = vsel %vm83, %v279, 0.0
    %v288 = vrot.slane %v287, 4
    %v289 = vadd.f32 %v287, %v288
    %v290 = vrot.slane %v289, 2
    %v291 = vadd.f32 %v289, %v290
    %v292 = vrot.slane %v291, 1
    %v293 = vadd.f32 %v291, %v292
    %v294 = vld [vmem:[#allocation8] sm:$0xff]
    %v295 = vld [vmem:[#allocation8 + $0x8] sm:$0xff]
    %v296 = vld [vmem:[#allocation8 + $0x10] sm:$0xff]
    %v297 = vld [vmem:[#allocation8 + $0x18] sm:$0xff]
    %v298 = vld [vmem:[%s6] sm:$0x1]
    %v300 = vlaneseq
    %v301 = vshrl.u32 %v300, 7
    %v302 = vsub.s32 0, %v301
    %v303 = vrot.slane %v298, %v302
    %v307 = vsel %vm206, %v293, %v286
    %v308 = vsel %vm83, %v307, 0
    %310 = vmatprep.subr.mxu0 0.0
    %311 = vmatpush1.msra.mxu0 0.0
    %312 = vmatprep.subr.mxu0 0.0
    %313 = vmatpush1.msra.mxu0 0.0
    %314 = vmatprep.subr.mxu0 0.0
    %315 = vmatpush1.msra.mxu0 0.0
    %316 = vmatprep.subr.mxu0 0.0
    %317 = vmatpush1.msra.mxu0 0.0
    %318 = vmatprep.subr.mxu0 0.0
    %319 = vmatpush1.msra.mxu0 0.0
    %320 = vmatprep.subr.mxu0 0.0
    %321 = vmatpush1.msra.mxu0 0.0
    %322 = vmatprep.subr.mxu0 0.0
    %323 = vmatpush1.msra.mxu0 0.0
    %324 = vmatprep.subr.mxu0 0.0
    %325 = vmatpush1.msra.mxu0 0.0
    %326 = vmatprep.subr.mxu0 0.0
    %327 = vmatpush1.msra.mxu0 0.0
    %328 = vmatprep.subr.mxu0 0.0
    %329 = vmatpush1.msra.mxu0 0.0
    %330 = vmatprep.subr.mxu0 0.0
    %331 = vmatpush1.msra.mxu0 0.0
    %332 = vmatprep.subr.mxu0 0.0
    %333 = vmatpush1.msra.mxu0 0.0
    %334 = vmatprep.subr.mxu0 0.0
    %335 = vmatpush1.msra.mxu0 %v297
    %336 = vmatprep.subr.mxu0 0.0
    %337 = vmatpush1.msra.mxu0 %v296
    %338 = vmatprep.subr.mxu0 0.0
    %339 = vmatpush1.msra.mxu0 %v295
    %340 = vmatprep.subr.mxu0 0.0
    %341 = vmatpush1.msra.mxu0 %v294
    %342 = vmatprep.subr.mxu0 0.0
    %343 = vmatpush2.msra.mxu0 0.0
    %344 = vmatprep.subr.mxu0 0.0
    %345 = vmatpush2.msra.mxu0 0.0
    %346 = vmatprep.subr.mxu0 0.0
    %347 = vmatpush2.msra.mxu0 0.0
    %348 = vmatprep.subr.mxu0 0.0
    %349 = vmatpush2.msra.mxu0 0.0
    %350 = vmatprep.subr.mxu0 0.0
    %351 = vmatpush2.msra.mxu0 0.0
    %352 = vmatprep.subr.mxu0 0.0
    %353 = vmatpush2.msra.mxu0 0.0
    %354 = vmatprep.subr.mxu0 0.0
    %355 = vmatpush2.msra.mxu0 0.0
    %356 = vmatprep.subr.mxu0 0.0
    %357 = vmatpush2.msra.mxu0 0.0
    %358 = vmatprep.subr.mxu0 0.0
    %359 = vmatpush2.msra.mxu0 0.0
    %360 = vmatprep.subr.mxu0 0.0
    %361 = vmatpush2.msra.mxu0 0.0
    %362 = vmatprep.subr.mxu0 0.0
    %363 = vmatpush2.msra.mxu0 0.0
    %364 = vmatprep.subr.mxu0 0.0
    %365 = vmatpush2.msra.mxu0 0.0
    %366 = vmatprep.subr.mxu0 0.0
    %367 = vmatpush2.msra.mxu0 0.0
    %368 = vmatprep.subr.mxu0 0.0
    %369 = vmatpush2.msra.mxu0 0.0
    %370 = vmatprep.subr.mxu0 0.0
    %371 = vmatpush2.msra.mxu0 0.0
    %372 = vmatprep.subr.mxu0 0.0
    %373 = vmatpush2.msra.mxu0 0.0
    %374 = vmatprep.mubr.f32.mxu0 0.0
    %375 = vmatmul.mubr.f32.gmra.mxu0 %v308
    %v376 = vpop.f32.mrf.mxu0
    %v377 = vadd.f32 %v303, %v376
    %v378 = vpop.f32.mrf.mxu0
    %379 = vdwg.mxu0
    %380 = vst [vmem:[#allocation9] sm:$0x3] %v377
    // Predicated region
    $region42: #{tpu_custom_call.1} parent=1 // pred_check
      _
    $region43: #{tpu_custom_call.1} parent=1 // pred_check_branch
      %382 = sbr.rel (0) target = $region45
    $region44: #{tpu_custom_call.1} parent=1 // pred_region
      %s384 = ssub.s32 32, 32
      %385 = vsyncadd [#allocation5], %s384
      %s387 = sshll.u32 [#allocation9], 4
      %s388 = int_to_ptr.vmem [resolvable:$true] %s387
      %390 = dma.vmem_to_hbm [thread:$0]  %s388, 32, %s7, [#allocation5]
    $region45: #{tpu_custom_call.1} parent=1 // pred_fallthru
      _
    // Predicated region
    $region46: #{tpu_custom_call.1} parent=1 // pred_check
      _
    $region47: #{tpu_custom_call.1} parent=1 // pred_check_branch
      %392 = sbr.rel (0) target = $region49
    $region48: #{tpu_custom_call.1} parent=1 // pred_region
      %393 = dma.done [#allocation5], 32
    $region49: #{tpu_custom_call.1} parent=1 // pred_fallthru
      _
    %394 = vsyncpa [#allocation4], 1
    %395 = vsyncpa [#allocation7], 1
    %396 = vsyncpa [#allocation5], 1

</llo_original>
